<compile_context>
chip_gen: v7x
topology: tpu7x:2x2x1
jax: 0.10.0
libtpu: 0.0.40
codegen_flags: <defaults>
</compile_context>

<pallas_src>
import functools

import jax
import jax.numpy as jnp
from jax import lax
from jax.experimental import pallas as pl
from jax.experimental.pallas import tpu as pltpu


def _round_up(n, m):
    return ((n + m - 1) // m) * m


def _default_eltwise_dtype():
    """bf16 elementwise path on chips with a bf16 VPU/EUP (v6e/v7x), else f32."""
    try:
        kind = jax.devices()[0].device_kind.lower()
    except Exception:  # pragma: no cover - detection failure -> safe default
        return jnp.float32
    if ("v6" in kind) or ("v7" in kind) or ("tpu7" in kind):
        return jnp.bfloat16
    return jnp.float32


def _fcn_kernel(x_ref, *refs, eltwise_dtype):
    """Fused MLP on one batch tile, computed transposed (batch on lanes).

    refs = (w0, b0, w1, b1, ..., wL, bL, outT_ref)
      x_ref : (block_b, n_input)  -- natural layout, any float dtype
      w     : (out_features, in_features)   (torch nn.Linear layout)
      b     : (out_features, 1)             (pre-cast to eltwise_dtype)
      outT  : (n_data, block_b)             (lane-dense batch)
    """
    o_ref = refs[-1]
    wb = refs[:-1]
    n_layers = len(wb) // 2

    w0 = wb[0][...]                          # (h0, n_input)
    x = x_ref[...].astype(w0.dtype)          # (block_b, n_input)
    # First layer: transpose folded into the MXU contraction.
    # Result is (h0, block_b): lane-dense, f32 accumulator.
    h = lax.dot_general(w0, x, (((1,), (1,)), ((), ())),
                        preferred_element_type=jnp.float32)

    for layer in range(n_layers):
        if layer > 0:
            w = wb[2 * layer][...]           # (out, in_prev)
            h = jnp.dot(w, h.astype(w.dtype),
                        preferred_element_type=jnp.float32)
        b = wb[2 * layer + 1][...]           # (out, 1) in eltwise_dtype
        h = h.astype(eltwise_dtype) + b      # broadcast across batch lanes
        if layer < n_layers - 1:
            # SiLU(x) = x * sigmoid(x); sigmoid runs on the EUP slot.
            h = h * jax.nn.sigmoid(h)

    o_ref[...] = h.astype(o_ref.dtype)


def init_fcn_params(key, n_input, n_hidden, n_data, dtype=jnp.bfloat16):
    """nn.Linear-style init: U(-1/sqrt(fan_in), +1/sqrt(fan_in)).

    Weights stored in torch layout (out_features, in_features); biases as
    (out_features, 1) columns for the transposed (batch-on-lanes) kernel.
    """
    dims = [n_input] + list(n_hidden) + [n_data]
    params = []
    for i in range(len(dims) - 1):
        fan_in, fan_out = dims[i], dims[i + 1]
        key, kw, kb = jax.random.split(key, 3)
        bound = 1.0 / (fan_in ** 0.5)
        w = jax.random.uniform(kw, (fan_out, fan_in), jnp.float32,
                               -bound, bound).astype(dtype)
        b = jax.random.uniform(kb, (fan_out, 1), jnp.float32,
                               -bound, bound).astype(dtype)
        params.append((w, b))
    return params


def fcn_forward(x, params, *, block_b=4096, eltwise_dtype=None,
                transpose_output=False):
    """Run the fused FCN Pallas kernel.

    Args:
      x:       (B, n_input) input array (any float dtype; cast to the weight
               dtype inside the kernel -- pass bf16 x to halve its HBM read).
      params:  list of (W, b) with W:(out, in), b:(out, 1).
      block_b: batch tile (rounded to a multiple of 128 lanes); large tiles
               amortize the per-grid-step overhead.
      eltwise_dtype: dtype for bias-add / SiLU.  Default: bf16 on v6e/v7x,
               f32 otherwise.
      transpose_output: if True, return the kernel-native (n_data, B) layout
               and skip the trailing transpose pass.
    Returns:
      (B, n_data) array with x's dtype (or (n_data, B) if transpose_output).
    """
    B, n_input = x.shape
    n_data = params[-1][0].shape[0]
    out_dtype = x.dtype
    if eltwise_dtype is None:
        eltwise_dtype = _default_eltwise_dtype()

    # ---- Batch tiling ------------------------------------------------------
    if B <= 128:
        # Single full block; output last dim equals the full array dim so the
        # (8,128) layout rule is satisfied even for tiny batches.
        block_b = B
    else:
        block_b = max(128, _round_up(min(block_b, B), 128))
        # Keep both v7x TensorCores busy: make sure the "parallel" batch axis
        # has at least 2 grid steps (costs only ~0.35 us elsewhere).
        if block_b >= B:
            block_b = max(128, _round_up(pl.cdiv(B, 2), 128))
    grid = (pl.cdiv(B, block_b),)  # ragged edge handled by masked stores

    # ---- Specs / inputs ----------------------------------------------------
    # x in natural layout: contiguous DMA (n_input is the full last dim).
    in_specs = [pl.BlockSpec((block_b, n_input), lambda i: (i, 0))]
    flat_params = [x]
    for (w, b) in params:
        # Constant index_map: Pallas keeps these tiny tensors resident across
        # grid steps (no per-step weight DMA).
        in_specs.append(pl.BlockSpec(w.shape, lambda i: (0, 0)))
        in_specs.append(pl.BlockSpec(b.shape, lambda i: (0, 0)))
        flat_params.append(w)
        flat_params.append(b.astype(eltwise_dtype))  # pre-cast once, not per step

    out_specs = pl.BlockSpec((n_data, block_b), lambda i: (0, i))

    # Advisory cost hint for XLA scheduling of the surrounding graph.
    flops = 2 * B * sum(int(w.shape[0]) * int(w.shape[1]) for w, _ in params)
    transc = B * sum(int(w.shape[0]) for w, _ in params[:-1])
    bytes_acc = (x.size * x.dtype.itemsize
                 + B * n_data * jnp.dtype(out_dtype).itemsize
                 + sum(w.size * w.dtype.itemsize + b.size * b.dtype.itemsize
                       for w, b in params))
    cost = pl.CostEstimate(flops=int(flops), transcendentals=int(transc),
                           bytes_accessed=int(bytes_acc))

    outT = pl.pallas_call(
        functools.partial(_fcn_kernel, eltwise_dtype=eltwise_dtype),
        out_shape=jax.ShapeDtypeStruct((n_data, B), out_dtype),
        grid=grid,
        in_specs=in_specs,
        out_specs=out_specs,
        compiler_params=pltpu.CompilerParams(
            dimension_semantics=("parallel",)),
        cost_estimate=cost,
    )(*flat_params)

    if transpose_output:
        return outT
    # Layout plumbing back to the module's (B, n_data) convention.  n_data is
    # tiny (e.g. 4), so this pass is small; pass transpose_output=True to fuse
    # the transposed layout into the consumer instead.
    return outT.T


def fcn_reference(x, params, eltwise_dtype=jnp.float32):
    """Pure-JAX reference mirroring the kernel's mixed-precision path."""
    h = x
    for i, (w, b) in enumerate(params):
        acc = jnp.dot(h.astype(w.dtype).astype(jnp.float32),
                      w.astype(jnp.float32).T)
        h = acc.astype(eltwise_dtype) + b.reshape(1, -1).astype(eltwise_dtype)
        if i < len(params) - 1:
            h = h * jax.nn.sigmoid(h)
    return h.astype(x.dtype)


if __name__ == "__main__":
    # Shapes consistent with the module: n_input=16, n_hidden=[32, 32], n_data=4.
    n_input, n_hidden, n_data = 16, [32, 32], 4

    key = jax.random.PRNGKey(0)
    kx, kp = jax.random.split(key)
    # bf16 params halve weight/x-side HBM bytes; pass dtype=jnp.float32 for an
    # exact match to an f32 PyTorch FCN (activation dtype is now explicit).
    params = init_fcn_params(kp, n_input, n_hidden, n_data, dtype=jnp.bfloat16)
    eltwise = _default_eltwise_dtype()

    # Cases: tiny single-block batch, ragged multi-step grid (no pad pass),
    # and a larger batch that exercises the default tile + >=2-step split.
    cases = [(8, None), (300, 128), (1024, None)]
    for B, blk in cases:
        x = jax.random.normal(jax.random.fold_in(kx, B), (B, n_input),
                              jnp.float32)
        kwargs = {} if blk is None else {"block_b": blk}
        out = jax.block_until_ready(fcn_forward(x, params, **kwargs))
        ref = fcn_reference(x, params, eltwise_dtype=eltwise)
        assert out.shape == (B, n_data), out.shape
        err = float(jnp.max(jnp.abs(out.astype(jnp.float32)
                                    - ref.astype(jnp.float32))))
        # bf16 weights (and bf16 elementwise on v6e/v7x) -> loose tolerance.
        assert err < 5e-2, err

    print("KERNEL_OK")
</pallas_src>

<mosaic_0001>
module attributes {stable_mosaic.version = 11 : i64} {
  func.func @_fcn_kernel(%arg0: i32, %arg1: memref<8x16xf32, #tpu.memory_space<vmem>>, %arg2: memref<32x16xbf16, #tpu.memory_space<vmem>>, %arg3: memref<32x1xf32, #tpu.memory_space<vmem>>, %arg4: memref<32x32xbf16, #tpu.memory_space<vmem>>, %arg5: memref<32x1xf32, #tpu.memory_space<vmem>>, %arg6: memref<4x32xbf16, #tpu.memory_space<vmem>>, %arg7: memref<4x1xf32, #tpu.memory_space<vmem>>, %arg8: memref<4x8xf32, #tpu.memory_space<vmem>>) attributes {dimension_semantics = [#tpu.dimension_semantics<parallel>], iteration_bounds = array<i64: 1>, scalar_prefetch = 0 : i64, scratch_operands = 0 : i64, tpu.core_type = #tpu.core_type<tc>, window_params = [{transform_indices = @transform_0, window_bounds = array<i64: 8, 16>}, {pipeline_mode = #tpu.pipeline_mode<synchronous>, transform_indices = @transform_1, window_bounds = array<i64: 32, 16>}, {pipeline_mode = #tpu.pipeline_mode<synchronous>, transform_indices = @transform_2, window_bounds = array<i64: 32, 1>}, {pipeline_mode = #tpu.pipeline_mode<synchronous>, transform_indices = @transform_3, window_bounds = array<i64: 32, 32>}, {pipeline_mode = #tpu.pipeline_mode<synchronous>, transform_indices = @transform_4, window_bounds = array<i64: 32, 1>}, {pipeline_mode = #tpu.pipeline_mode<synchronous>, transform_indices = @transform_5, window_bounds = array<i64: 4, 32>}, {pipeline_mode = #tpu.pipeline_mode<synchronous>, transform_indices = @transform_6, window_bounds = array<i64: 4, 1>}, {transform_indices = @transform_7, window_bounds = array<i64: 4, 8>}]} {
    %c0 = arith.constant 0 : index
    %c0_0 = arith.constant 0 : index
    %0 = vector.load %arg2[%c0, %c0_0] : memref<32x16xbf16, #tpu.memory_space<vmem>>, vector<32x16xbf16>
    %c0_1 = arith.constant 0 : index
    %c0_2 = arith.constant 0 : index
    %1 = vector.load %arg1[%c0_1, %c0_2] : memref<8x16xf32, #tpu.memory_space<vmem>>, vector<8x16xf32>
    %2 = arith.truncf %1 : vector<8x16xf32> to vector<8x16xbf16>
    %cst = arith.constant dense<0.000000e+00> : vector<32x8xf32>
    %3 = tpu.matmul %0, %2, %cst {dimension_numbers = #tpu.dot_dimension_numbers<[1], [1], [0], [0], [0, 0, 1, 0], [], []>} : vector<32x16xbf16>, vector<8x16xbf16>, vector<32x8xf32> -> vector<32x8xf32>
    %c0_3 = arith.constant 0 : index
    %c0_4 = arith.constant 0 : index
    %4 = vector.load %arg3[%c0_3, %c0_4] : memref<32x1xf32, #tpu.memory_space<vmem>>, vector<32x1xf32>
    %5 = vector.broadcast %4 : vector<32x1xf32> to vector<32x8xf32>
    %6 = arith.addf %3, %5 : vector<32x8xf32>
    %7 = arith.negf %6 : vector<32x8xf32>
    %8 = math.exp %7 : vector<32x8xf32>
    %cst_5 = arith.constant 1.000000e+00 : f32
    %9 = vector.broadcast %cst_5 : f32 to vector<32x8xf32>
    %10 = arith.addf %9, %8 : vector<32x8xf32>
    %11 = arith.divf %9, %10 : vector<32x8xf32>
    %12 = arith.mulf %6, %11 : vector<32x8xf32>
    %c0_6 = arith.constant 0 : index
    %c0_7 = arith.constant 0 : index
    %13 = vector.load %arg4[%c0_6, %c0_7] : memref<32x32xbf16, #tpu.memory_space<vmem>>, vector<32x32xbf16>
    %14 = arith.truncf %12 : vector<32x8xf32> to vector<32x8xbf16>
    %cst_8 = arith.constant dense<0.000000e+00> : vector<32x8xf32>
    %15 = tpu.matmul %13, %14, %cst_8 {dimension_numbers = #tpu.dot_dimension_numbers<[1], [0], [0], [1], [0, 0, 1, 1], [], []>} : vector<32x32xbf16>, vector<32x8xbf16>, vector<32x8xf32> -> vector<32x8xf32>
    %c0_9 = arith.constant 0 : index
    %c0_10 = arith.constant 0 : index
    %16 = vector.load %arg5[%c0_9, %c0_10] : memref<32x1xf32, #tpu.memory_space<vmem>>, vector<32x1xf32>
    %17 = vector.broadcast %16 : vector<32x1xf32> to vector<32x8xf32>
    %18 = arith.addf %15, %17 : vector<32x8xf32>
    %19 = arith.negf %18 : vector<32x8xf32>
    %20 = math.exp %19 : vector<32x8xf32>
    %cst_11 = arith.constant 1.000000e+00 : f32
    %21 = vector.broadcast %cst_11 : f32 to vector<32x8xf32>
    %22 = arith.addf %21, %20 : vector<32x8xf32>
    %23 = arith.divf %21, %22 : vector<32x8xf32>
    %24 = arith.mulf %18, %23 : vector<32x8xf32>
    %c0_12 = arith.constant 0 : index
    %c0_13 = arith.constant 0 : index
    %25 = vector.load %arg6[%c0_12, %c0_13] : memref<4x32xbf16, #tpu.memory_space<vmem>>, vector<4x32xbf16>
    %26 = arith.truncf %24 : vector<32x8xf32> to vector<32x8xbf16>
    %cst_14 = arith.constant dense<0.000000e+00> : vector<4x8xf32>
    %27 = tpu.matmul %25, %26, %cst_14 {dimension_numbers = #tpu.dot_dimension_numbers<[1], [0], [0], [1], [0, 0, 1, 1], [], []>} : vector<4x32xbf16>, vector<32x8xbf16>, vector<4x8xf32> -> vector<4x8xf32>
    %c0_15 = arith.constant 0 : index
    %c0_16 = arith.constant 0 : index
    %28 = vector.load %arg7[%c0_15, %c0_16] : memref<4x1xf32, #tpu.memory_space<vmem>>, vector<4x1xf32>
    %29 = vector.broadcast %28 : vector<4x1xf32> to vector<4x8xf32>
    %30 = arith.addf %27, %29 : vector<4x8xf32>
    %c0_17 = arith.constant 0 : index
    %c0_18 = arith.constant 0 : index
    %31 = vector.load %arg8[%c0_17, %c0_18] : memref<4x8xf32, #tpu.memory_space<vmem>>, vector<4x8xf32>
    tpu.vector_store %arg8[%c0_17, %c0_18], %30 {strides = array<i32>} : memref<4x8xf32, #tpu.memory_space<vmem>>, vector<4x8xf32>,
    return
  }
  func.func @transform_0(%arg0: i32) -> (i32, i32) {
    %c0_i32 = arith.constant 0 : i32
    %c0_i32_0 = arith.constant 0 : i32
    return %arg0, %c0_i32 : i32, i32
  }
  func.func @transform_1(%arg0: i32) -> (i32, i32) {
    %c0_i32 = arith.constant 0 : i32
    %c0_i32_0 = arith.constant 0 : i32
    %c0_i32_1 = arith.constant 0 : i32
    return %c0_i32, %c0_i32_0 : i32, i32
  }
  func.func @transform_2(%arg0: i32) -> (i32, i32) {
    %c0_i32 = arith.constant 0 : i32
    %c0_i32_0 = arith.constant 0 : i32
    %c0_i32_1 = arith.constant 0 : i32
    return %c0_i32, %c0_i32_0 : i32, i32
  }
  func.func @transform_3(%arg0: i32) -> (i32, i32) {
    %c0_i32 = arith.constant 0 : i32
    %c0_i32_0 = arith.constant 0 : i32
    %c0_i32_1 = arith.constant 0 : i32
    return %c0_i32, %c0_i32_0 : i32, i32
  }
  func.func @transform_4(%arg0: i32) -> (i32, i32) {
    %c0_i32 = arith.constant 0 : i32
    %c0_i32_0 = arith.constant 0 : i32
    %c0_i32_1 = arith.constant 0 : i32
    return %c0_i32, %c0_i32_0 : i32, i32
  }
  func.func @transform_5(%arg0: i32) -> (i32, i32) {
    %c0_i32 = arith.constant 0 : i32
    %c0_i32_0 = arith.constant 0 : i32
    %c0_i32_1 = arith.constant 0 : i32
    return %c0_i32, %c0_i32_0 : i32, i32
  }
  func.func @transform_6(%arg0: i32) -> (i32, i32) {
    %c0_i32 = arith.constant 0 : i32
    %c0_i32_0 = arith.constant 0 : i32
    %c0_i32_1 = arith.constant 0 : i32
    return %c0_i32, %c0_i32_0 : i32, i32
  }
  func.func @transform_7(%arg0: i32) -> (i32, i32) {
    %c0_i32 = arith.constant 0 : i32
    %c0_i32_0 = arith.constant 0 : i32
    return %c0_i32, %arg0 : i32, i32
  }
}

</mosaic_0001>

<llo_original>
// kernel: tpu_custom_call.1
$region0: #{tpu_custom_call.1}
  #allocation0 [shape = 'u32[]', space=smem, size = 0x4, offset = 0x4, fixed_abs, tag = 'smem constant byte address 0x4 - core index']
  #allocation1 [shape = 'u32[144,128]{1,0:T(1,128)}', space=vmem, size = 0x12000, scoped, tag = 'internal scratch']
  %s0 = inlined_call_operand.vmem [shape: f32[8,16], index: 0, kind: input, shape index: {}]
  %s1 = inlined_call_operand.vmem [shape: bf16[32,16], index: 1, kind: input, shape index: {}]
  %s2 = inlined_call_operand.vmem [shape: f32[32,1], index: 2, kind: input, shape index: {}]
  %s3 = inlined_call_operand.vmem [shape: bf16[32,32], index: 3, kind: input, shape index: {}]
  %s4 = inlined_call_operand.vmem [shape: f32[32,1], index: 4, kind: input, shape index: {}]
  %s5 = inlined_call_operand.vmem [shape: bf16[4,32], index: 5, kind: input, shape index: {}]
  %s6 = inlined_call_operand.vmem [shape: f32[4,1], index: 6, kind: input, shape index: {}]
  %s7 = inlined_call_operand.hbm [shape: f32[4,8], index: 7, kind: output, shape index: {}]
  %s8 = sld [smem:[#allocation0]]
  $region38: #{tpu_custom_call.1} parent=0
    _
  %s10 = ssub.s32 1, %s8
  %s11 = scalar_select 0, %s10, %s8
  $region1: #{tpu_custom_call.1} parent=0
    #allocation2 [shape = 'u8[2048]{0}', space=vmem, size = 0x800, scoped, tag = 'output window, operand 0, single buffered']
    #allocation3 [shape = 's32[1]{0}', space=sflag, size = 0x4, scoped, tag = 'scoped memory for tpu_custom_call.1']
    %12 = vsyncpa [#allocation3], 0
    // Predicated region
    $region2: #{tpu_custom_call.1} parent=1 // pred_check
      _
    $region3: #{tpu_custom_call.1} parent=1 // pred_check_branch
      %14 = sbr.rel (0) target = $region5
    $region4: #{tpu_custom_call.1} parent=1 // pred_region
      _
    $region5: #{tpu_custom_call.1} parent=1 // pred_fallthru
      _
    // Predicated region
    $region6: #{tpu_custom_call.1} parent=1 // pred_check
      _
    $region7: #{tpu_custom_call.1} parent=1 // pred_check_branch
      %16 = sbr.rel (0) target = $region9
    $region8: #{tpu_custom_call.1} parent=1 // pred_region
      _
    $region9: #{tpu_custom_call.1} parent=1 // pred_fallthru
      _
    // Predicated region
    $region10: #{tpu_custom_call.1} parent=1 // pred_check
      _
    $region11: #{tpu_custom_call.1} parent=1 // pred_check_branch
      %18 = sbr.rel (0) target = $region13
    $region12: #{tpu_custom_call.1} parent=1 // pred_region
      _
    $region13: #{tpu_custom_call.1} parent=1 // pred_fallthru
      _
    // Predicated region
    $region14: #{tpu_custom_call.1} parent=1 // pred_check
      _
    $region15: #{tpu_custom_call.1} parent=1 // pred_check_branch
      %20 = sbr.rel (0) target = $region17
    $region16: #{tpu_custom_call.1} parent=1 // pred_region
      _
    $region17: #{tpu_custom_call.1} parent=1 // pred_fallthru
      _
    // Predicated region
    $region18: #{tpu_custom_call.1} parent=1 // pred_check
      _
    $region19: #{tpu_custom_call.1} parent=1 // pred_check_branch
      %22 = sbr.rel (0) target = $region21
    $region20: #{tpu_custom_call.1} parent=1 // pred_region
      _
    $region21: #{tpu_custom_call.1} parent=1 // pred_fallthru
      _
    // Predicated region
    $region22: #{tpu_custom_call.1} parent=1 // pred_check
      _
    $region23: #{tpu_custom_call.1} parent=1 // pred_check_branch
      %24 = sbr.rel (0) target = $region25
    $region24: #{tpu_custom_call.1} parent=1 // pred_region
      _
    $region25: #{tpu_custom_call.1} parent=1 // pred_fallthru
      _
    // Predicated region
    $region26: #{tpu_custom_call.1} parent=1 // pred_check
      _
    $region27: #{tpu_custom_call.1} parent=1 // pred_check_branch
      %26 = sbr.rel (0) target = $region29
    $region28: #{tpu_custom_call.1} parent=1 // pred_region
      _
    $region29: #{tpu_custom_call.1} parent=1 // pred_fallthru
      _
    %v28 = vld [vmem:[%s1] sm:$0xf]
    %v29 = vld [vmem:[%s1 + $0x4] sm:$0xf]
    %v30 = vld [vmem:[%s1 + $0x8] sm:$0xf]
    %v31 = vld [vmem:[%s1 + $0xc] sm:$0xf]
    %v32 = vld [vmem:[%s0] sm:$0xff]
    %v33 = vpack.c.bf16 %v32, %v32
    %v34 = vld [vmem:[%s2] sm:$0xff]
    %v35 = vld [vmem:[%s2 + $0x8] sm:$0xff]
    %v36 = vld [vmem:[%s2 + $0x10] sm:$0xff]
    %v37 = vld [vmem:[%s2 + $0x18] sm:$0xff]
    %39 = vset.pattern.permute.xlu0 0
    %40 = vperm.xlu0 %39, %v34
    %v41 = vpop.permute.xlu0 %40
    %44 = vset.pattern.permute.xlu0 0
    %45 = vperm.xlu0 %44, %v35
    %v46 = vpop.permute.xlu0 %45
    %49 = vset.pattern.permute.xlu0 0
    %50 = vperm.xlu0 %49, %v36
    %v51 = vpop.permute.xlu0 %50
    %54 = vset.pattern.permute.xlu0 0
    %55 = vperm.xlu0 %54, %v37
    %v56 = vpop.permute.xlu0 %55
    %v62 = vunpack.c.l.b16 %v28
    %v63 = vunpack.c.l.b16 %v29
    %v64 = vunpack.c.l.b16 %v30
    %v65 = vunpack.c.l.b16 %v31
    %v66 = vpack.c.b16 %v63, %v62
    %v67 = vpack.c.b16 %v65, %v64
    %vm68 = vcmask 130048
    %v70 = vsel %vm68, %v66, 0
    %v73 = vsel %vm68, %v67, 0
    %v76 = vsel %vm68, %v33, 0
    %78 = vmatprep.subr.bf16.mxu0 0
    %79 = vmatpush1.bf16.xpose.msra.mxu0 %v76
    %80 = vmatprep.subr.bf16.mxu0 0
    %81 = vmatpush1.bf16.xpose.msra.mxu0 0
    %82 = vmatprep.subr.bf16.mxu0 0
    %83 = vmatpush1.bf16.xpose.msra.mxu0 0
    %84 = vmatprep.subr.bf16.mxu0 0
    %85 = vmatpush1.bf16.xpose.msra.mxu0 0
    %86 = vmatprep.subr.bf16.mxu0 0
    %87 = vmatpush1.bf16.xpose.msra.mxu0 0
    %88 = vmatprep.subr.bf16.mxu0 0
    %89 = vmatpush1.bf16.xpose.msra.mxu0 0
    %90 = vmatprep.subr.bf16.mxu0 0
    %91 = vmatpush1.bf16.xpose.msra.mxu0 0
    %92 = vmatprep.subr.bf16.mxu0 0
    %93 = vmatpush1.bf16.xpose.msra.mxu0 0
    %94 = vmatprep.subr.bf16.mxu0 0
    %95 = vmatpush1.bf16.xpose.msra.mxu0 0
    %96 = vmatprep.subr.bf16.mxu0 0
    %97 = vmatpush1.bf16.xpose.msra.mxu0 0
    %98 = vmatprep.subr.bf16.mxu0 0
    %99 = vmatpush1.bf16.xpose.msra.mxu0 0
    %100 = vmatprep.subr.bf16.mxu0 0
    %101 = vmatpush1.bf16.xpose.msra.mxu0 0
    %102 = vmatprep.subr.bf16.mxu0 0
    %103 = vmatpush1.bf16.xpose.msra.mxu0 0
    %104 = vmatprep.subr.bf16.mxu0 0
    %105 = vmatpush1.bf16.xpose.msra.mxu0 0
    %106 = vmatprep.subr.bf16.mxu0 0
    %107 = vmatpush1.bf16.xpose.msra.mxu0 0
    %108 = vmatprep.subr.bf16.mxu0 0
    %109 = vmatpush1.bf16.xpose.msra.mxu0 0
    %110 = vmatprep.mubr.bf16.mxu0 0
    %111 = vmatmul.mubr.bf16.gmra.mrb[0].mxu0 %v70
    %v112 = vpop.f32.mrb[0].mxu0
    %v113 = vadd.f32 %v41, %v112
    %v114 = vpop.f32.mrb[0].mxu0
    %v115 = vpop.f32.mrb[0].mxu0
    %v116 = vadd.f32 %v46, %v115
    %v117 = vpop.f32.mrb[0].mxu0
    %118 = vmatprep.mubr.bf16.mxu0 0
    %119 = vmatmul.mubr.bf16.gmra.mrb[0].mxu0 %v73
    %v120 = vpop.f32.mrb[0].mxu0
    %v121 = vadd.f32 %v51, %v120
    %v122 = vpop.f32.mrb[0].mxu0
    %v123 = vpop.f32.mrb[0].mxu0
    %v124 = vadd.f32 %v56, %v123
    %v125 = vpop.f32.mrb[0].mxu0
    %126 = vdwg.mxu0
    %v127 = vxor.u32 %v113, 2147483648
    %v128 = vxor.u32 %v116, 2147483648
    %v129 = vxor.u32 %v121, 2147483648
    %v130 = vxor.u32 %v124, 2147483648
    %v131 = vmul.f32 %v127, 1.442695
    %v132 = vpow.pop %v131
    %v133 = vmul.f32 %v128, 1.442695
    %v134 = vpow.pop %v133
    %v135 = vmul.f32 %v129, 1.442695
    %v136 = vpow.pop %v135
    %v137 = vmul.f32 %v130, 1.442695
    %v138 = vpow.pop %v137
    %v139 = vadd.f32 %v132, 1.0
    %v140 = vadd.f32 %v134, 1.0
    %v141 = vadd.f32 %v136, 1.0
    %v142 = vadd.f32 %v138, 1.0
    %v143 = vrcp.pop %v139
    %v144 = vmul.f32 1.0, %v143
    %v145 = vrcp.pop %v140
    %v146 = vmul.f32 1.0, %v145
    %v147 = vrcp.pop %v141
    %v148 = vmul.f32 1.0, %v147
    %v149 = vrcp.pop %v142
    %v150 = vmul.f32 1.0, %v149
    %v151 = vmul.f32 %v113, %v144
    %v152 = vmul.f32 %v116, %v146
    %v153 = vmul.f32 %v121, %v148
    %v154 = vmul.f32 %v124, %v150
    %v155 = vld [vmem:[%s3] sm:$0xf]
    %v156 = vld [vmem:[%s3 + $0x4] sm:$0xf]
    %v157 = vld [vmem:[%s3 + $0x8] sm:$0xf]
    %v158 = vld [vmem:[%s3 + $0xc] sm:$0xf]
    %v159 = vpack.c.bf16 %v152, %v151
    %v160 = vpack.c.bf16 %v154, %v153
    %v161 = vld [vmem:[%s4] sm:$0xff]
    %v162 = vld [vmem:[%s4 + $0x8] sm:$0xff]
    %v163 = vld [vmem:[%s4 + $0x10] sm:$0xff]
    %v164 = vld [vmem:[%s4 + $0x18] sm:$0xff]
    %166 = vset.pattern.permute.xlu0 0
    %167 = vperm.xlu0 %166, %v161
    %v168 = vpop.permute.xlu0 %167
    %171 = vset.pattern.permute.xlu0 0
    %172 = vperm.xlu0 %171, %v162
    %v173 = vpop.permute.xlu0 %172
    %176 = vset.pattern.permute.xlu0 0
    %177 = vperm.xlu0 %176, %v163
    %v178 = vpop.permute.xlu0 %177
    %181 = vset.pattern.permute.xlu0 0
    %182 = vperm.xlu0 %181, %v164
    %v183 = vpop.permute.xlu0 %182
    %v189 = vunpack.c.l.b16 %v155
    %v190 = vunpack.c.l.b16 %v156
    %v191 = vunpack.c.l.b16 %v157
    %v192 = vunpack.c.l.b16 %v158
    %v193 = vpack.c.b16 %v190, %v189
    %v194 = vpack.c.b16 %v192, %v191
    %vm195 = vcmask 261120
    %v197 = vsel %vm195, %v193, 0
    %v200 = vsel %vm195, %v194, 0
    %202 = vmatprep.subr.bf16.mxu0 0
    %203 = vmatpush1.bf16.msra.mxu0 %v159
    %204 = vmatprep.subr.bf16.mxu0 0
    %205 = vmatpush1.bf16.msra.mxu0 %v160
    %206 = vmatprep.subr.bf16.mxu0 0
    %207 = vmatpush1.bf16.msra.mxu0 0
    %208 = vmatprep.subr.bf16.mxu0 0
    %209 = vmatpush1.bf16.msra.mxu0 0
    %210 = vmatprep.subr.bf16.mxu0 0
    %211 = vmatpush1.bf16.msra.mxu0 0
    %212 = vmatprep.subr.bf16.mxu0 0
    %213 = vmatpush1.bf16.msra.mxu0 0
    %214 = vmatprep.subr.bf16.mxu0 0
    %215 = vmatpush1.bf16.msra.mxu0 0
    %216 = vmatprep.subr.bf16.mxu0 0
    %217 = vmatpush1.bf16.msra.mxu0 0
    %218 = vmatprep.subr.bf16.mxu0 0
    %219 = vmatpush1.bf16.msra.mxu0 0
    %220 = vmatprep.subr.bf16.mxu0 0
    %221 = vmatpush1.bf16.msra.mxu0 0
    %222 = vmatprep.subr.bf16.mxu0 0
    %223 = vmatpush1.bf16.msra.mxu0 0
    %224 = vmatprep.subr.bf16.mxu0 0
    %225 = vmatpush1.bf16.msra.mxu0 0
    %226 = vmatprep.subr.bf16.mxu0 0
    %227 = vmatpush1.bf16.msra.mxu0 0
    %228 = vmatprep.subr.bf16.mxu0 0
    %229 = vmatpush1.bf16.msra.mxu0 0
    %230 = vmatprep.subr.bf16.mxu0 0
    %231 = vmatpush1.bf16.msra.mxu0 0
    %232 = vmatprep.subr.bf16.mxu0 0
    %233 = vmatpush1.bf16.msra.mxu0 0
    %234 = vmatprep.mubr.bf16.mxu0 0
    %235 = vmatmul.mubr.bf16.gmra.mrb[0].mxu0 %v197
    %v236 = vpop.f32.mrb[0].mxu0
    %v237 = vadd.f32 %v168, %v236
    %v238 = vpop.f32.mrb[0].mxu0
    %v239 = vpop.f32.mrb[0].mxu0
    %v240 = vadd.f32 %v173, %v239
    %v241 = vpop.f32.mrb[0].mxu0
    %242 = vmatprep.mubr.bf16.mxu0 0
    %243 = vmatmul.mubr.bf16.gmra.mrb[0].mxu0 %v200
    %v244 = vpop.f32.mrb[0].mxu0
    %v245 = vadd.f32 %v178, %v244
    %v246 = vpop.f32.mrb[0].mxu0
    %v247 = vpop.f32.mrb[0].mxu0
    %v248 = vadd.f32 %v183, %v247
    %v249 = vpop.f32.mrb[0].mxu0
    %250 = vdwg.mxu0
    %v251 = vxor.u32 %v237, 2147483648
    %v252 = vxor.u32 %v240, 2147483648
    %v253 = vxor.u32 %v245, 2147483648
    %v254 = vxor.u32 %v248, 2147483648
    %v255 = vmul.f32 %v251, 1.442695
    %v256 = vpow.pop %v255
    %v257 = vmul.f32 %v252, 1.442695
    %v258 = vpow.pop %v257
    %v259 = vmul.f32 %v253, 1.442695
    %v260 = vpow.pop %v259
    %v261 = vmul.f32 %v254, 1.442695
    %v262 = vpow.pop %v261
    %v263 = vadd.f32 %v256, 1.0
    %v264 = vadd.f32 %v258, 1.0
    %v265 = vadd.f32 %v260, 1.0
    %v266 = vadd.f32 %v262, 1.0
    %v267 = vrcp.pop %v263
    %v268 = vmul.f32 1.0, %v267
    %v269 = vrcp.pop %v264
    %v270 = vmul.f32 1.0, %v269
    %v271 = vrcp.pop %v265
    %v272 = vmul.f32 1.0, %v271
    %v273 = vrcp.pop %v266
    %v274 = vmul.f32 1.0, %v273
    %v275 = vmul.f32 %v237, %v268
    %v276 = vmul.f32 %v240, %v270
    %v277 = vmul.f32 %v245, %v272
    %v278 = vmul.f32 %v248, %v274
    %v279 = vld [vmem:[%s5] sm:$0x3]
    %v280 = vpack.c.bf16 %v276, %v275
    %v281 = vpack.c.bf16 %v278, %v277
    %v282 = vld [vmem:[%s6] sm:$0xf]
    %284 = vset.pattern.permute.xlu0 0
    %285 = vperm.xlu0 %284, %v282
    %v286 = vpop.permute.xlu0 %285
    %v289 = vsel %vm195, %v279, 0
    %291 = vmatprep.subr.bf16.mxu0 0
    %292 = vmatpush1.bf16.msra.mxu0 %v280
    %293 = vmatprep.subr.bf16.mxu0 0
    %294 = vmatpush1.bf16.msra.mxu0 %v281
    %295 = vmatprep.subr.bf16.mxu0 0
    %296 = vmatpush1.bf16.msra.mxu0 0
    %297 = vmatprep.subr.bf16.mxu0 0
    %298 = vmatpush1.bf16.msra.mxu0 0
    %299 = vmatprep.subr.bf16.mxu0 0
    %300 = vmatpush1.bf16.msra.mxu0 0
    %301 = vmatprep.subr.bf16.mxu0 0
    %302 = vmatpush1.bf16.msra.mxu0 0
    %303 = vmatprep.subr.bf16.mxu0 0
    %304 = vmatpush1.bf16.msra.mxu0 0
    %305 = vmatprep.subr.bf16.mxu0 0
    %306 = vmatpush1.bf16.msra.mxu0 0
    %307 = vmatprep.subr.bf16.mxu0 0
    %308 = vmatpush1.bf16.msra.mxu0 0
    %309 = vmatprep.subr.bf16.mxu0 0
    %310 = vmatpush1.bf16.msra.mxu0 0
    %311 = vmatprep.subr.bf16.mxu0 0
    %312 = vmatpush1.bf16.msra.mxu0 0
    %313 = vmatprep.subr.bf16.mxu0 0
    %314 = vmatpush1.bf16.msra.mxu0 0
    %315 = vmatprep.subr.bf16.mxu0 0
    %316 = vmatpush1.bf16.msra.mxu0 0
    %317 = vmatprep.subr.bf16.mxu0 0
    %318 = vmatpush1.bf16.msra.mxu0 0
    %319 = vmatprep.subr.bf16.mxu0 0
    %320 = vmatpush1.bf16.msra.mxu0 0
    %321 = vmatprep.subr.bf16.mxu0 0
    %322 = vmatpush1.bf16.msra.mxu0 0
    %323 = vmatprep.mubr.bf16.mxu0 0
    %324 = vmatmul.mubr.bf16.gmra.mrb[0].mxu0 %v289
    %v325 = vpop.f32.mrb[0].mxu0
    %v326 = vadd.f32 %v286, %v325
    %v327 = vpop.f32.mrb[0].mxu0
    %v328 = vpop.f32.mrb[0].mxu0
    %v329 = vpop.f32.mrb[0].mxu0
    %330 = vdwg.mxu0
    %vm331 = vcmask 60416
    %332 = vst.msk [vmem:[#allocation2] sm:$0xf] %vm331, %v326
    // Predicated region
    $region30: #{tpu_custom_call.1} parent=1 // pred_check
      _
    $region31: #{tpu_custom_call.1} parent=1 // pred_check_branch
      %334 = sbr.rel (0) target = $region33
    $region32: #{tpu_custom_call.1} parent=1 // pred_region
      %s336 = ssub.s32 64, 64
      %337 = vsyncadd [#allocation3], %s336
      %s339 = sshll.u32 [#allocation2], 4
      %s340 = int_to_ptr.vmem [resolvable:$true] %s339
      %342 = dma.vmem_to_hbm [thread:$0]  %s340, 64, %s7, [#allocation3]
    $region33: #{tpu_custom_call.1} parent=1 // pred_fallthru
      _
    // Predicated region
    $region34: #{tpu_custom_call.1} parent=1 // pred_check
      _
    $region35: #{tpu_custom_call.1} parent=1 // pred_check_branch
      %344 = sbr.rel (0) target = $region37
    $region36: #{tpu_custom_call.1} parent=1 // pred_region
      %345 = dma.done [#allocation3], 64
    $region37: #{tpu_custom_call.1} parent=1 // pred_fallthru
      _
    %346 = vsyncpa [#allocation3], 1

</llo_original>
